<compile_context>
chip_gen: v7x
topology: tpu7x:2x2x1
jax: 0.10.0
libtpu: 0.0.40
codegen_flags: <defaults>
</compile_context>

<pallas_src>
import math
import functools

import jax
import jax.numpy as jnp
from jax.experimental import pallas as pl
from jax.experimental.pallas import tpu as pltpu

EMBEDDING_DIM = 64
DROPOUT_P = 0.6927432474127322


def _attn_dropout_matmul_kernel(qk_ref, v_ref, bits_ref, o_ref, *,
                                scale, keep_threshold, inv_keep):
    """Single grid step over all B*H heads.

    qk_ref:   [BH, S, S]  f32   attention scores
    v_ref:    [BH, S, D]  f32   values
    bits_ref: [BH, S, S]  u32   host-generated random bits for dropout
    o_ref:    [S, BH*D]   f32   heads packed along lanes (lane-dense store)
    """
    # --- scale + numerically stable softmax over the last axis (VPU / EUP) ---
    s = qk_ref[...] * scale                                   # [BH, S, S]
    m = jnp.max(s, axis=-1, keepdims=True)
    e = jnp.exp(s - m)
    denom = jnp.sum(e, axis=-1, keepdims=True)
    # Fold the inverted-dropout 1/(1-p) scale into the softmax normalizer and
    # compute the reciprocal on the EUP (approx) -> frees VALU slots.
    inv = pl.reciprocal(denom, approx=True) * inv_keep

    # --- inverted dropout: direct integer-threshold compare on raw bits ---
    keep = bits_ref[...] >= jnp.uint32(keep_threshold)
    probs = jnp.where(keep, e * inv, 0.0)                     # [BH, S, S]

    # --- one small MXU matmul per head; pack results along the lane axis so
    #     the output block is a single lane-dense [S, BH*D] tile ---
    # TODO(synk): for large S, tile the softmax axis (flash-style) and cast the
    # matmul operands to bf16; unnecessary at these tiny shapes.
    bh = qk_ref.shape[0]
    outs = [
        jnp.dot(probs[h], v_ref[h], preferred_element_type=jnp.float32)
        for h in range(bh)
    ]
    o_ref[...] = jnp.concatenate(outs, axis=-1).astype(o_ref.dtype)


def model_forward(qk, val, dropout_p, dropout_key):
    """qk: [B,H,S,S] f32, val: [B,H,S,D] f32 -> [B,H,S,D] f32."""
    B, H, S, Sk = qk.shape
    Bv, Hv, Sk2, D = val.shape
    assert (B, H, Sk) == (Bv, Hv, Sk2), "qk / val shapes must be attention-consistent"
    BH = B * H

    p = float(dropout_p)
    scale = 1.0 / math.sqrt(EMBEDDING_DIM)
    inv_keep = 1.0 / (1.0 - p)
    keep_threshold = min(int(round(p * 2.0 ** 32)), 2 ** 32 - 1)

    qk_f = qk.reshape(BH, S, Sk)
    v_f = val.reshape(BH, Sk, D)
    # Dropout randomness generated host-side (pltpu.prng_* has no CPU/interpret lowering).
    bits = jax.random.bits(dropout_key, (BH, S, Sk), dtype=jnp.uint32)

    kernel = functools.partial(
        _attn_dropout_matmul_kernel,
        scale=scale, keep_threshold=keep_threshold, inv_keep=inv_keep,
    )

    # Entire problem (~9 KiB) fits VMEM trivially -> a single grid step.
    out_dense = pl.pallas_call(
        kernel,
        out_shape=jax.ShapeDtypeStruct((S, BH * D), qk.dtype),
        grid=(1,),
        in_specs=[
            pl.BlockSpec((BH, S, Sk), lambda i: (0, 0, 0)),
            pl.BlockSpec((BH, Sk, D), lambda i: (0, 0, 0)),
            pl.BlockSpec((BH, S, Sk), lambda i: (0, 0, 0)),
        ],
        out_specs=pl.BlockSpec((S, BH * D), lambda i: (0, 0)),
        compiler_params=pltpu.CompilerParams(
            dimension_semantics=("parallel",),
        ),
    )(qk_f, v_f, bits)

    # Wrapper-side layout plumbing only: [S, BH*D] -> [B, H, S, D].
    out = jnp.transpose(out_dense.reshape(S, BH, D), (1, 0, 2)).reshape(B, H, S, D)
    return out


def _reference(qk, val, dropout_p, dropout_key):
    """Pure-JAX reference using the identical dropout mask (sanity check)."""
    B, H, S, Sk = qk.shape
    p = float(dropout_p)
    keep_threshold = min(int(round(p * 2.0 ** 32)), 2 ** 32 - 1)
    bits = jax.random.bits(dropout_key, (B * H, S, Sk), dtype=jnp.uint32)
    keep = (bits >= jnp.uint32(keep_threshold)).reshape(B, H, S, Sk)
    sm = jax.nn.softmax(qk * (1.0 / math.sqrt(EMBEDDING_DIM)), axis=-1)
    dropped = jnp.where(keep, sm / (1.0 - p), 0.0)
    return jnp.einsum("bhqk,bhkd->bhqd", dropped, val)


if __name__ == "__main__":
    key = jax.random.PRNGKey(0)
    k1, k2, k3 = jax.random.split(key, 3)

    B, H, S, D = 1, 2, 8, EMBEDDING_DIM
    qk = jax.random.normal(k1, (B, H, S, S), dtype=jnp.float32)    # attention scores
    val = jax.random.normal(k2, (B, H, S, D), dtype=jnp.float32)   # values

    out = model_forward(qk, val, DROPOUT_P, dropout_key=k3)
    out = jax.block_until_ready(out)

    assert out.shape == (B, H, S, D)
    assert out.dtype == jnp.float32
    assert bool(jnp.all(jnp.isfinite(out)))

    # Loose tolerance: kernel uses the approximate (EUP / bf16-in-interpret)
    # reciprocal for the softmax normalizer.
    ref = _reference(qk, val, DROPOUT_P, k3)
    assert bool(jnp.allclose(out, ref, rtol=5e-2, atol=1e-1))

    print("KERNEL_OK")
</pallas_src>

<mosaic_0001>
module attributes {stable_mosaic.version = 11 : i64} {
  func.func @_attn_dropout_matmul_kernel(%arg0: i32, %arg1: memref<2x8x8xf32, #tpu.memory_space<vmem>>, %arg2: memref<2x8x64xf32, #tpu.memory_space<vmem>>, %arg3: memref<2x8x8xi32, #tpu.memory_space<vmem>>, %arg4: memref<8x128xf32, #tpu.memory_space<vmem>>) attributes {dimension_semantics = [#tpu.dimension_semantics<parallel>], iteration_bounds = array<i64: 1>, scalar_prefetch = 0 : i64, scratch_operands = 0 : i64, tpu.core_type = #tpu.core_type<tc>, window_params = [{pipeline_mode = #tpu.pipeline_mode<synchronous>, transform_indices = @transform_0, window_bounds = array<i64: 2, 8, 8>}, {pipeline_mode = #tpu.pipeline_mode<synchronous>, transform_indices = @transform_1, window_bounds = array<i64: 2, 8, 64>}, {pipeline_mode = #tpu.pipeline_mode<synchronous>, transform_indices = @transform_2, window_bounds = array<i64: 2, 8, 8>}, {pipeline_mode = #tpu.pipeline_mode<synchronous>, transform_indices = @transform_3, window_bounds = array<i64: 8, 128>}]} {
    %c0 = arith.constant 0 : index
    %c0_0 = arith.constant 0 : index
    %c0_1 = arith.constant 0 : index
    %0 = vector.load %arg1[%c0, %c0_0, %c0_1] : memref<2x8x8xf32, #tpu.memory_space<vmem>>, vector<2x8x8xf32>
    %cst = arith.constant 1.250000e-01 : f32
    %1 = vector.broadcast %cst : f32 to vector<2x8x8xf32>
    %2 = arith.mulf %0, %1 : vector<2x8x8xf32>
    %cst_2 = arith.constant dense<0xFF800000> : vector<2x8xf32>
    %3 = vector.multi_reduction <maximumf>, %2, %cst_2 [2] : vector<2x8x8xf32> to vector<2x8xf32>
    %4 = vector.shape_cast %3 : vector<2x8xf32> to vector<2x8x1xf32>
    %5 = vector.broadcast %4 : vector<2x8x1xf32> to vector<2x8x8xf32>
    %6 = arith.subf %2, %5 : vector<2x8x8xf32>
    %7 = math.exp %6 : vector<2x8x8xf32>
    %cst_3 = arith.constant dense<0.000000e+00> : vector<2x8xf32>
    %8 = vector.multi_reduction <add>, %7, %cst_3 [2] : vector<2x8x8xf32> to vector<2x8xf32>
    %9 = vector.shape_cast %8 : vector<2x8xf32> to vector<2x8x1xf32>
    %10 = tpu.reciprocal %9 {approx = true} : vector<2x8x1xf32> -> vector<2x8x1xf32>
    %cst_4 = arith.constant 3.25460696 : f32
    %11 = vector.broadcast %cst_4 : f32 to vector<2x8x1xf32>
    %12 = arith.mulf %10, %11 : vector<2x8x1xf32>
    %c0_5 = arith.constant 0 : index
    %c0_6 = arith.constant 0 : index
    %c0_7 = arith.constant 0 : index
    %13 = vector.load %arg3[%c0_5, %c0_6, %c0_7] : memref<2x8x8xi32, #tpu.memory_space<vmem>>, vector<2x8x8xi32>
    %c-1319657704_i32 = arith.constant -1319657704 : i32
    %14 = vector.broadcast %c-1319657704_i32 : i32 to vector<2x8x8xi32>
    %15 = arith.cmpi uge, %13, %14 : vector<2x8x8xi32>
    %16 = vector.broadcast %12 : vector<2x8x1xf32> to vector<2x8x8xf32>
    %17 = arith.mulf %7, %16 : vector<2x8x8xf32>
    %cst_8 = arith.constant 0.000000e+00 : f32
    %18 = vector.broadcast %cst_8 : f32 to vector<2x8x8xf32>
    %19 = arith.select %15, %17, %18 : vector<2x8x8xi1>, vector<2x8x8xf32>
    %20 = vector.extract_strided_slice %19 {offsets = [0, 0, 0], sizes = [1, 8, 8], strides = [1, 1, 1]} : vector<2x8x8xf32> to vector<1x8x8xf32>
    %21 = vector.shape_cast %20 : vector<1x8x8xf32> to vector<8x8xf32>
    %c0_9 = arith.constant 0 : index
    %c0_10 = arith.constant 0 : index
    %c0_11 = arith.constant 0 : index
    %22 = vector.load %arg2[%c0_9, %c0_10, %c0_11] : memref<2x8x64xf32, #tpu.memory_space<vmem>>, vector<1x8x64xf32>
    %23 = vector.shape_cast %22 : vector<1x8x64xf32> to vector<8x64xf32>
    %cst_12 = arith.constant dense<0.000000e+00> : vector<8x64xf32>
    %24 = tpu.matmul %21, %23, %cst_12 {dimension_numbers = #tpu.dot_dimension_numbers<[1], [0], [0], [1], [0, 0, 1, 1], [], []>} : vector<8x8xf32>, vector<8x64xf32>, vector<8x64xf32> -> vector<8x64xf32>
    %25 = vector.extract_strided_slice %19 {offsets = [1, 0, 0], sizes = [1, 8, 8], strides = [1, 1, 1]} : vector<2x8x8xf32> to vector<1x8x8xf32>
    %26 = vector.shape_cast %25 : vector<1x8x8xf32> to vector<8x8xf32>
    %c1 = arith.constant 1 : index
    %c0_13 = arith.constant 0 : index
    %c0_14 = arith.constant 0 : index
    %27 = vector.load %arg2[%c1, %c0_13, %c0_14] : memref<2x8x64xf32, #tpu.memory_space<vmem>>, vector<1x8x64xf32>
    %28 = vector.shape_cast %27 : vector<1x8x64xf32> to vector<8x64xf32>
    %cst_15 = arith.constant dense<0.000000e+00> : vector<8x64xf32>
    %29 = tpu.matmul %26, %28, %cst_15 {dimension_numbers = #tpu.dot_dimension_numbers<[1], [0], [0], [1], [0, 0, 1, 1], [], []>} : vector<8x8xf32>, vector<8x64xf32>, vector<8x64xf32> -> vector<8x64xf32>
    %30 = tpu.concatenate %24, %29 in 1 : vector<8x64xf32>, vector<8x64xf32> -> vector<8x128xf32>
    %c0_16 = arith.constant 0 : index
    %c0_17 = arith.constant 0 : index
    %31 = vector.load %arg4[%c0_16, %c0_17] : memref<8x128xf32, #tpu.memory_space<vmem>>, vector<8x128xf32>
    tpu.vector_store %arg4[%c0_16, %c0_17], %30 {strides = array<i32>} : memref<8x128xf32, #tpu.memory_space<vmem>>, vector<8x128xf32>,
    return
  }
  func.func @transform_0(%arg0: i32) -> (i32, i32, i32) {
    %c0_i32 = arith.constant 0 : i32
    %c0_i32_0 = arith.constant 0 : i32
    %c0_i32_1 = arith.constant 0 : i32
    %c0_i32_2 = arith.constant 0 : i32
    return %c0_i32, %c0_i32_0, %c0_i32_1 : i32, i32, i32
  }
  func.func @transform_1(%arg0: i32) -> (i32, i32, i32) {
    %c0_i32 = arith.constant 0 : i32
    %c0_i32_0 = arith.constant 0 : i32
    %c0_i32_1 = arith.constant 0 : i32
    %c0_i32_2 = arith.constant 0 : i32
    return %c0_i32, %c0_i32_0, %c0_i32_1 : i32, i32, i32
  }
  func.func @transform_2(%arg0: i32) -> (i32, i32, i32) {
    %c0_i32 = arith.constant 0 : i32
    %c0_i32_0 = arith.constant 0 : i32
    %c0_i32_1 = arith.constant 0 : i32
    %c0_i32_2 = arith.constant 0 : i32
    return %c0_i32, %c0_i32_0, %c0_i32_1 : i32, i32, i32
  }
  func.func @transform_3(%arg0: i32) -> (i32, i32) {
    %c0_i32 = arith.constant 0 : i32
    %c0_i32_0 = arith.constant 0 : i32
    %c0_i32_1 = arith.constant 0 : i32
    return %c0_i32, %c0_i32_0 : i32, i32
  }
}

</mosaic_0001>

<llo_original>
// kernel: tpu_custom_call.1
$region0: #{tpu_custom_call.1}
  #allocation0 [shape = 'u32[]', space=smem, size = 0x4, offset = 0x4, fixed_abs, tag = 'smem constant byte address 0x4 - core index']
  #allocation1 [shape = 'u32[144,128]{1,0:T(1,128)}', space=vmem, size = 0x12000, scoped, tag = 'internal scratch']
  %s0 = inlined_call_operand.hbm [shape: f32[2,8,8], index: 0, kind: input, shape index: {}]
  %s1 = inlined_call_operand.hbm [shape: f32[2,8,64], index: 1, kind: input, shape index: {}]
  %s2 = inlined_call_operand.hbm [shape: u32[2,8,8], index: 2, kind: input, shape index: {}]
  %s3 = inlined_call_operand.hbm [shape: f32[8,128], index: 3, kind: output, shape index: {}]
  %s4 = sld [smem:[#allocation0]]
  $region34: #{tpu_custom_call.1} parent=0
    _
  %s6 = ssub.s32 1, %s4
  %s7 = scalar_select 0, %s6, %s4
  $region1: #{tpu_custom_call.1} parent=0
    #allocation2 [shape = 'u8[8192]{0}', space=vmem, size = 0x2000, scoped, tag = 'input window, operand 0, single buffered']
    #allocation3 [shape = 's32[1]{0}', space=sflag, size = 0x4, scoped, tag = 'scoped memory for tpu_custom_call.1']
    #allocation4 [shape = 's32[1]{0}', space=sflag, size = 0x4, scoped, tag = 'scoped memory for tpu_custom_call.1']
    #allocation5 [shape = 'u8[8192]{0}', space=vmem, size = 0x2000, scoped, tag = 'input window, operand 1, single buffered']
    #allocation6 [shape = 's32[1]{0}', space=sflag, size = 0x4, scoped, tag = 'scoped memory for tpu_custom_call.1']
    #allocation7 [shape = 'u8[8192]{0}', space=vmem, size = 0x2000, scoped, tag = 'input window, operand 2, single buffered']
    #allocation8 [shape = 'u8[4096]{0}', space=vmem, size = 0x1000, scoped, tag = 'output window, operand 0, single buffered']
    %8 = vsyncpa [#allocation3], 0
    %9 = vsyncpa [#allocation6], 0
    %10 = vsyncpa [#allocation4], 0
    // Predicated region
    $region2: #{tpu_custom_call.1} parent=1 // pred_check
      _
    $region3: #{tpu_custom_call.1} parent=1 // pred_check_branch
      %12 = sbr.rel (0) target = $region5
    $region4: #{tpu_custom_call.1} parent=1 // pred_region
      %s14 = ssub.s32 256, 256
      %15 = vsyncadd [#allocation3], %s14
      %s16 = sshll.u32 [#allocation2], 4
      %s17 = int_to_ptr.vmem [resolvable:$true] %s16
      %22 = dma.hbm_to_vmem [thread:$0]  %s0, 256, %s17, [#allocation3], 128, 128, 8
    $region5: #{tpu_custom_call.1} parent=1 // pred_fallthru
      _
    // Predicated region
    $region6: #{tpu_custom_call.1} parent=1 // pred_check
      _
    $region7: #{tpu_custom_call.1} parent=1 // pred_check_branch
      %24 = sbr.rel (0) target = $region9
    $region8: #{tpu_custom_call.1} parent=1 // pred_region
      %s26 = ssub.s32 256, 256
      %27 = vsyncadd [#allocation6], %s26
      %s28 = sshll.u32 [#allocation5], 4
      %s29 = int_to_ptr.vmem [resolvable:$true] %s28
      %34 = dma.hbm_to_vmem [thread:$0]  %s1, 256, %s29, [#allocation6], 128, 128, 8
    $region9: #{tpu_custom_call.1} parent=1 // pred_fallthru
      _
    // Predicated region
    $region10: #{tpu_custom_call.1} parent=1 // pred_check
      _
    $region11: #{tpu_custom_call.1} parent=1 // pred_check_branch
      %36 = sbr.rel (0) target = $region13
    $region12: #{tpu_custom_call.1} parent=1 // pred_region
      %s38 = ssub.s32 256, 256
      %39 = vsyncadd [#allocation6], %s38
      %s40 = sshll.u32 [#allocation7], 4
      %s41 = int_to_ptr.vmem [resolvable:$true] %s40
      %46 = dma.hbm_to_vmem [thread:$0]  %s2, 256, %s41, [#allocation6], 128, 128, 8
    $region13: #{tpu_custom_call.1} parent=1 // pred_fallthru
      _
    // Predicated region
    $region14: #{tpu_custom_call.1} parent=1 // pred_check
      _
    $region15: #{tpu_custom_call.1} parent=1 // pred_check_branch
      %48 = sbr.rel (0) target = $region17
    $region16: #{tpu_custom_call.1} parent=1 // pred_region
      %49 = dma.done [#allocation3], 256
    $region17: #{tpu_custom_call.1} parent=1 // pred_fallthru
      _
    // Predicated region
    $region18: #{tpu_custom_call.1} parent=1 // pred_check
      _
    $region19: #{tpu_custom_call.1} parent=1 // pred_check_branch
      %51 = sbr.rel (0) target = $region21
    $region20: #{tpu_custom_call.1} parent=1 // pred_region
      %52 = dma.done [#allocation6], 256
    $region21: #{tpu_custom_call.1} parent=1 // pred_fallthru
      _
    // Predicated region
    $region22: #{tpu_custom_call.1} parent=1 // pred_check
      _
    $region23: #{tpu_custom_call.1} parent=1 // pred_check_branch
      %54 = sbr.rel (0) target = $region25
    $region24: #{tpu_custom_call.1} parent=1 // pred_region
      %55 = dma.done [#allocation6], 256
    $region25: #{tpu_custom_call.1} parent=1 // pred_fallthru
      _
    %v56 = vld [vmem:[#allocation2] sm:$0xff]
    %v57 = vld [vmem:[#allocation2 + $0x8] sm:$0xff]
    %v58 = vmul.f32 %v56, 0.125
    %v59 = vmul.f32 %v57, 0.125
    %vm60 = vcmask 64512
    %v61 = vsel %vm60, %v58, -inf
    %62 = vmax.xlane.f32.xlu0 %v61
    %v63 = vpop.xlane.xlu0 %62
    %v64 = vsel %vm60, %v59, -inf
    %65 = vmax.xlane.f32.xlu0 %v64
    %v66 = vpop.xlane.xlu0 %65
    %v67 = vsub.f32 %v58, %v63
    %v68 = vsub.f32 %v59, %v66
    %v69 = vmul.f32 %v67, 1.442695
    %v70 = vpow.pop %v69
    %v71 = vmul.f32 %v68, 1.442695
    %v72 = vpow.pop %v71
    %v73 = vsel %vm60, %v70, 0.0
    %74 = vadd.xlane.f32.xlu0 %v73
    %v75 = vpop.xlane.xlu0 %74
    %v76 = vsel %vm60, %v72, 0.0
    %77 = vadd.xlane.f32.xlu0 %v76
    %v78 = vpop.xlane.xlu0 %77
    %v79 = vrcp.pop %v75
    %v80 = vrcp.pop %v78
    %v81 = vmul.f32 %v79, 3.254607
    %v82 = vmul.f32 %v80, 3.254607
    %v83 = vld [vmem:[#allocation7] sm:$0xff]
    %v84 = vld [vmem:[#allocation7 + $0x8] sm:$0xff]
    %vm85 = vcmp.ge.u32.totalorder %v83, 2975309592
    %vm86 = vcmp.ge.u32.totalorder %v84, 2975309592
    %v87 = vmul.f32 %v70, %v81
    %v88 = vmul.f32 %v72, %v82
    %v89 = vsel %vm85, %v87, 0.0
    %v90 = vsel %vm86, %v88, 0.0
    %v91 = vld [vmem:[#allocation5] sm:$0xff]
    %v93 = vsel %vm60, %v89, 0
    %95 = vmatprep.subr.mxu0 0.0
    %96 = vmatpush1.msra.mxu0 %v91
    %97 = vmatprep.subr.mxu0 0.0
    %98 = vmatpush1.msra.mxu0 0.0
    %99 = vmatprep.subr.mxu0 0.0
    %100 = vmatpush1.msra.mxu0 0.0
    %101 = vmatprep.subr.mxu0 0.0
    %102 = vmatpush1.msra.mxu0 0.0
    %103 = vmatprep.subr.mxu0 0.0
    %104 = vmatpush1.msra.mxu0 0.0
    %105 = vmatprep.subr.mxu0 0.0
    %106 = vmatpush1.msra.mxu0 0.0
    %107 = vmatprep.subr.mxu0 0.0
    %108 = vmatpush1.msra.mxu0 0.0
    %109 = vmatprep.subr.mxu0 0.0
    %110 = vmatpush1.msra.mxu0 0.0
    %111 = vmatprep.subr.mxu0 0.0
    %112 = vmatpush1.msra.mxu0 0.0
    %113 = vmatprep.subr.mxu0 0.0
    %114 = vmatpush1.msra.mxu0 0.0
    %115 = vmatprep.subr.mxu0 0.0
    %116 = vmatpush1.msra.mxu0 0.0
    %117 = vmatprep.subr.mxu0 0.0
    %118 = vmatpush1.msra.mxu0 0.0
    %119 = vmatprep.subr.mxu0 0.0
    %120 = vmatpush1.msra.mxu0 0.0
    %121 = vmatprep.subr.mxu0 0.0
    %122 = vmatpush1.msra.mxu0 0.0
    %123 = vmatprep.subr.mxu0 0.0
    %124 = vmatpush1.msra.mxu0 0.0
    %125 = vmatprep.subr.mxu0 0.0
    %126 = vmatpush1.msra.mxu0 0.0
    %127 = vmatprep.subr.mxu0 0.0
    %128 = vmatpush1.msra.mxu0 0.0
    %129 = vmatprep.subr.mxu0 0.0
    %130 = vmatpush1.msra.mxu0 0.0
    %131 = vmatprep.subr.mxu0 0.0
    %132 = vmatpush1.msra.mxu0 0.0
    %133 = vmatprep.subr.mxu0 0.0
    %134 = vmatpush1.msra.mxu0 0.0
    %135 = vmatprep.subr.mxu0 0.0
    %136 = vmatpush1.msra.mxu0 0.0
    %137 = vmatprep.subr.mxu0 0.0
    %138 = vmatpush1.msra.mxu0 0.0
    %139 = vmatprep.subr.mxu0 0.0
    %140 = vmatpush1.msra.mxu0 0.0
    %141 = vmatprep.subr.mxu0 0.0
    %142 = vmatpush1.msra.mxu0 0.0
    %143 = vmatprep.subr.mxu0 0.0
    %144 = vmatpush1.msra.mxu0 0.0
    %145 = vmatprep.subr.mxu0 0.0
    %146 = vmatpush1.msra.mxu0 0.0
    %147 = vmatprep.subr.mxu0 0.0
    %148 = vmatpush1.msra.mxu0 0.0
    %149 = vmatprep.subr.mxu0 0.0
    %150 = vmatpush1.msra.mxu0 0.0
    %151 = vmatprep.subr.mxu0 0.0
    %152 = vmatpush1.msra.mxu0 0.0
    %153 = vmatprep.subr.mxu0 0.0
    %154 = vmatpush1.msra.mxu0 0.0
    %155 = vmatprep.subr.mxu0 0.0
    %156 = vmatpush1.msra.mxu0 0.0
    %157 = vmatprep.subr.mxu0 0.0
    %158 = vmatpush1.msra.mxu0 0.0
    %159 = vmatprep.mubr.f32.mxu0 0.0
    %160 = vmatmul.mubr.f32.gmra.mrb[0].mxu0 %v93
    %v161 = vpop.f32.mrb[0].mxu0
    %v162 = vadd.f32 0.0, %v161
    %v163 = vpop.f32.mrb[0].mxu0
    %164 = vdwg.mxu0
    %s165 = scalar_lea.vmem [#allocation5], 8
    %v166 = vld [vmem:[%s165] sm:$0xff]
    %v168 = vsel %vm60, %v90, 0
    %170 = vmatprep.subr.mxu0 0.0
    %171 = vmatpush1.msra.mxu0 %v166
    %172 = vmatprep.subr.mxu0 0.0
    %173 = vmatpush1.msra.mxu0 0.0
    %174 = vmatprep.subr.mxu0 0.0
    %175 = vmatpush1.msra.mxu0 0.0
    %176 = vmatprep.subr.mxu0 0.0
    %177 = vmatpush1.msra.mxu0 0.0
    %178 = vmatprep.subr.mxu0 0.0
    %179 = vmatpush1.msra.mxu0 0.0
    %180 = vmatprep.subr.mxu0 0.0
    %181 = vmatpush1.msra.mxu0 0.0
    %182 = vmatprep.subr.mxu0 0.0
    %183 = vmatpush1.msra.mxu0 0.0
    %184 = vmatprep.subr.mxu0 0.0
    %185 = vmatpush1.msra.mxu0 0.0
    %186 = vmatprep.subr.mxu0 0.0
    %187 = vmatpush1.msra.mxu0 0.0
    %188 = vmatprep.subr.mxu0 0.0
    %189 = vmatpush1.msra.mxu0 0.0
    %190 = vmatprep.subr.mxu0 0.0
    %191 = vmatpush1.msra.mxu0 0.0
    %192 = vmatprep.subr.mxu0 0.0
    %193 = vmatpush1.msra.mxu0 0.0
    %194 = vmatprep.subr.mxu0 0.0
    %195 = vmatpush1.msra.mxu0 0.0
    %196 = vmatprep.subr.mxu0 0.0
    %197 = vmatpush1.msra.mxu0 0.0
    %198 = vmatprep.subr.mxu0 0.0
    %199 = vmatpush1.msra.mxu0 0.0
    %200 = vmatprep.subr.mxu0 0.0
    %201 = vmatpush1.msra.mxu0 0.0
    %202 = vmatprep.subr.mxu0 0.0
    %203 = vmatpush1.msra.mxu0 0.0
    %204 = vmatprep.subr.mxu0 0.0
    %205 = vmatpush1.msra.mxu0 0.0
    %206 = vmatprep.subr.mxu0 0.0
    %207 = vmatpush1.msra.mxu0 0.0
    %208 = vmatprep.subr.mxu0 0.0
    %209 = vmatpush1.msra.mxu0 0.0
    %210 = vmatprep.subr.mxu0 0.0
    %211 = vmatpush1.msra.mxu0 0.0
    %212 = vmatprep.subr.mxu0 0.0
    %213 = vmatpush1.msra.mxu0 0.0
    %214 = vmatprep.subr.mxu0 0.0
    %215 = vmatpush1.msra.mxu0 0.0
    %216 = vmatprep.subr.mxu0 0.0
    %217 = vmatpush1.msra.mxu0 0.0
    %218 = vmatprep.subr.mxu0 0.0
    %219 = vmatpush1.msra.mxu0 0.0
    %220 = vmatprep.subr.mxu0 0.0
    %221 = vmatpush1.msra.mxu0 0.0
    %222 = vmatprep.subr.mxu0 0.0
    %223 = vmatpush1.msra.mxu0 0.0
    %224 = vmatprep.subr.mxu0 0.0
    %225 = vmatpush1.msra.mxu0 0.0
    %226 = vmatprep.subr.mxu0 0.0
    %227 = vmatpush1.msra.mxu0 0.0
    %228 = vmatprep.subr.mxu0 0.0
    %229 = vmatpush1.msra.mxu0 0.0
    %230 = vmatprep.subr.mxu0 0.0
    %231 = vmatpush1.msra.mxu0 0.0
    %232 = vmatprep.subr.mxu0 0.0
    %233 = vmatpush1.msra.mxu0 0.0
    %234 = vmatprep.mubr.f32.mxu0 0.0
    %235 = vmatmul.mubr.f32.gmra.mrb[0].mxu0 %v168
    %v236 = vpop.f32.mrb[0].mxu0
    %v237 = vadd.f32 0.0, %v236
    %v238 = vpop.f32.mrb[0].mxu0
    %239 = vdwg.mxu0
    %241 = vrot.lane.b32.xlu0 %v237, 64
    %v242 = vpop.permute.xlu0 %241
    %vm244 = vcmask 523264
    %v245 = vsel %vm244, %v162, %v242
    %246 = vst [vmem:[#allocation8] sm:$0xff] %v245
    // Predicated region
    $region26: #{tpu_custom_call.1} parent=1 // pred_check
      _
    $region27: #{tpu_custom_call.1} parent=1 // pred_check_branch
      %248 = sbr.rel (0) target = $region29
    $region28: #{tpu_custom_call.1} parent=1 // pred_region
      %s250 = ssub.s32 128, 128
      %251 = vsyncadd [#allocation4], %s250
      %s253 = sshll.u32 [#allocation8], 4
      %s254 = int_to_ptr.vmem [resolvable:$true] %s253
      %256 = dma.vmem_to_hbm [thread:$0]  %s254, 128, %s3, [#allocation4]
    $region29: #{tpu_custom_call.1} parent=1 // pred_fallthru
      _
    // Predicated region
    $region30: #{tpu_custom_call.1} parent=1 // pred_check
      _
    $region31: #{tpu_custom_call.1} parent=1 // pred_check_branch
      %258 = sbr.rel (0) target = $region33
    $region32: #{tpu_custom_call.1} parent=1 // pred_region
      %259 = dma.done [#allocation4], 128
    $region33: #{tpu_custom_call.1} parent=1 // pred_fallthru
      _
    %260 = vsyncpa [#allocation3], 1
    %261 = vsyncpa [#allocation6], 1
    %262 = vsyncpa [#allocation4], 1

</llo_original>
